<compile_context>
chip_gen: v7x
topology: tpu7x:2x2x1
jax: 0.10.0
libtpu: 0.0.40
codegen_flags: <defaults>
</compile_context>

<pallas_src>
import jax
import jax.numpy as jnp
from jax.experimental import pallas as pl
from jax.experimental.pallas import tpu as pltpu

RANK = 128  # LoRA rank fixed by the module


def _round_up(x, m):
    return (x + m - 1) // m * m


def _detect_tpu_generation():
    """Best-effort TPU generation detection (None -> conservative defaults)."""
    try:
        kind = jax.devices()[0].device_kind.lower().replace(" ", "")
    except Exception:
        return None
    if "v7" in kind:
        return 7
    if "v6" in kind or "trillium" in kind:
        return 6
    if "v5lite" in kind or "v5e" in kind:
        return 5
    return None


def _mn_tile(dim, target, granule):
    # Full-extent block is always legal; otherwise keep granule alignment so
    # the MXU stays filled and the (8,128) rule holds.
    if dim <= target:
        return dim
    return max(granule, (target // granule) * granule)


def _k_tile(K, target):
    # tk must be a multiple of 128 that divides K (no partial K block may feed
    # garbage into the accumulator), or the full K extent.
    if K <= target:
        return K
    t = (target // 128) * 128
    while t >= 128:
        if K % t == 0:
            return t
        t -= 128
    return K  # odd K: single full-K block (rare; still correct)


def _tile_config(M, N, K, gen):
    """Returns (tm, tn, tk, vmem_limit_bytes or None)."""
    if gen == 5:      # v5e: 4x128^2 MXU, 128 MiB VMEM
        granule, tm_t, tn_t, tk_t, vmem = 128, 512, 1024, 1024, 96 * 2**20
    elif gen == 6:    # v6e: 2x256^2 MXU, 128 MiB VMEM
        granule, tm_t, tn_t, tk_t, vmem = 256, 512, 1024, 1024, 64 * 2**20
    elif gen == 7:    # v7x: 2x256^2 MXU, only 64 MiB VMEM per TensorCore
        granule, tm_t, tn_t, tk_t, vmem = 256, 256, 1024, 1024, 48 * 2**20
    else:             # unknown generation: safe moderate tiles, default VMEM
        granule, tm_t, tn_t, tk_t, vmem = 128, 256, 512, 512, None

    if M <= 64:       # decode-shaped call: weight-streaming (HBM) bound
        tn_t = max(tn_t, 1024)
        tk_t = max(tk_t, 2048)

    tm = _mn_tile(M, tm_t, granule)
    tn = _mn_tile(N, tn_t, granule)
    tk = _k_tile(K, tk_t)

    # v7x has 2 TensorCores: guarantee >=2 blocks along a "parallel" axis so
    # megacore sharding has work to split (decode shapes otherwise run on 1 TC).
    if gen == 7 and M <= tm and N <= tn and N > 256:
        tn = max(256, _round_up(pl.cdiv(N, 2), 256))

    return tm, tn, tk, vmem


def _lora_kernel(x_ref, w_ref, xa_ref, bsc_ref, bias_ref, o_ref, acc_ref):
    # x_ref:    (tm, tk)    tile of x
    # w_ref:    (tk, tn)    tile of W^T
    # xa_ref:   (tm, RANK)  x @ lora_A (precomputed once per call)
    # bsc_ref:  (RANK, tn)  lora_B / RANK
    # bias_ref: (1, tn)     bias (f32)
    # o_ref:    (tm, tn)    output tile
    # acc_ref:  (tm, tn)    f32 accumulator (persists across the K axis)
    k = pl.program_id(2)

    @pl.when(k == 0)
    def _init():
        # Fold the bias into the accumulator init (no zero-fill + add pass).
        acc_ref[...] = jnp.broadcast_to(bias_ref[...], acc_ref.shape)

    acc_ref[...] += jnp.dot(x_ref[...], w_ref[...],
                            preferred_element_type=jnp.float32)

    @pl.when(k == pl.num_programs(2) - 1)
    def _finalize():
        # Rank-128 LoRA tail, once per output tile.
        acc_ref[...] += jnp.dot(xa_ref[...], bsc_ref[...],
                                preferred_element_type=jnp.float32)
        o_ref[...] = acc_ref[...].astype(o_ref.dtype)


def prepare_lora_params(w, bias, lora_B, *, param_dtype=None):
    """One-time parameter preparation (at load time, NOT per forward call).

    w:      [N, K] torch-Linear layout (frozen)
    bias:   [N]
    lora_B: [RANK, N]
    Returns (w_t [K, N], b_scaled [RANK, N], bias2d [1, N] f32).
    On v5e/v6e/v7x pass param_dtype=jnp.bfloat16 for the fast MXU path.
    """
    N, K = w.shape
    w_t = w.T                                  # [K, N], materialized once
    b_scaled = lora_B * (1.0 / RANK)           # fold 1/RANK into the weight
    if param_dtype is not None:
        w_t = w_t.astype(param_dtype)
        b_scaled = b_scaled.astype(param_dtype)
    bias2d = bias.reshape(1, N).astype(jnp.float32)
    return w_t, b_scaled, bias2d


def lora_forward(x, lora_A, w_t, b_scaled, bias2d, *, out_dtype=None,
                 tiles=None, vmem_limit_bytes=None):
    """x: [M, K], lora_A: [K, RANK], w_t: [K, N], b_scaled: [RANK, N],
    bias2d: [1, N].  Compute dtype follows w_t.dtype; accumulation is f32.
    Returns [M, N] in out_dtype (default: x.dtype)."""
    M, K = x.shape
    K_w, N = w_t.shape
    assert K_w == K, "w_t must be [K, N]"
    assert lora_A.shape == (K, RANK)
    assert b_scaled.shape == (RANK, N)
    cdt = w_t.dtype
    out_dtype = out_dtype if out_dtype is not None else x.dtype

    xc = x.astype(cdt)
    # xa = x @ lora_A computed exactly once per call (tiny (M,K)@(K,128)).
    xa = jnp.dot(xc, lora_A.astype(cdt),
                 preferred_element_type=jnp.float32).astype(cdt)

    gen = _detect_tpu_generation()
    if tiles is None:
        tm, tn, tk, auto_vmem = _tile_config(M, N, K, gen)
    else:
        tm, tn, tk = tiles
        auto_vmem = None
    if vmem_limit_bytes is None:
        vmem_limit_bytes = auto_vmem

    nk = pl.cdiv(K, tk)  # tk divides K (or equals K) by construction
    grid = (pl.cdiv(M, tm), pl.cdiv(N, tn), nk)

    # Decode-shaped calls: deepen the weight-tile pipeline to hide DMA latency.
    w_spec_kwargs = {}
    if M <= 64 and nk >= 3 and hasattr(pl, "Buffered"):
        w_spec_kwargs["pipeline_mode"] = pl.Buffered(3)

    compiler_kwargs = dict(
        dimension_semantics=("parallel", "parallel", "arbitrary"))
    if vmem_limit_bytes is not None:
        compiler_kwargs["vmem_limit_bytes"] = vmem_limit_bytes

    return pl.pallas_call(
        _lora_kernel,
        out_shape=jax.ShapeDtypeStruct((M, N), out_dtype),
        grid_spec=pltpu.PrefetchScalarGridSpec(
            num_scalar_prefetch=0,
            grid=grid,
            in_specs=[
                pl.BlockSpec((tm, tk), lambda i, j, k: (i, k)),       # x
                pl.BlockSpec((tk, tn), lambda i, j, k: (k, j),        # W^T
                             **w_spec_kwargs),
                pl.BlockSpec((tm, RANK), lambda i, j, k: (i, 0)),     # x @ A
                pl.BlockSpec((RANK, tn), lambda i, j, k: (0, j)),     # B/RANK
                pl.BlockSpec((1, tn), lambda i, j, k: (0, j)),        # bias
            ],
            out_specs=pl.BlockSpec((tm, tn), lambda i, j, k: (i, j)),
            scratch_shapes=[pltpu.VMEM((tm, tn), jnp.float32)],
        ),
        compiler_params=pltpu.CompilerParams(**compiler_kwargs),
    )(xc, w_t, xa, b_scaled, bias2d)


if __name__ == "__main__":
    key = jax.random.PRNGKey(0)
    k_x, k_w, k_b, k_a, k_lb = jax.random.split(key, 5)

    batch = 8
    in_features = 256
    out_features = 256

    x = jax.random.normal(k_x, (batch, in_features), dtype=jnp.float32)
    # Frozen linear params (torch Linear: weight [out, in], bias [out]).
    w = jax.random.normal(k_w, (out_features, in_features), dtype=jnp.float32) * 0.05
    bias = jax.random.normal(k_b, (out_features,), dtype=jnp.float32) * 0.05
    # lora_A ~ randn * 0.1 as in the module; lora_B is zeros at module init,
    # but use small random values so the LoRA path is actually exercised.
    lora_A = jax.random.normal(k_a, (in_features, RANK), dtype=jnp.float32) * 0.1
    lora_B = jax.random.normal(k_lb, (RANK, out_features), dtype=jnp.float32) * 0.1

    # Pure-JAX reference (module semantics).
    ref = x @ w.T + bias + (x @ lora_A) @ lora_B / RANK

    # --- f32 params: tight tolerance ---
    w_t, b_sc, bias2d = prepare_lora_params(w, bias, lora_B)
    out_f32 = jax.block_until_ready(lora_forward(x, lora_A, w_t, b_sc, bias2d))
    assert out_f32.shape == ref.shape and out_f32.dtype == ref.dtype
    assert jnp.allclose(out_f32, ref, atol=1e-4, rtol=1e-4), "f32 mismatch vs reference"

    # --- bf16 params + bf16 output (production fast path on v5e/v6e/v7x) ---
    w_t16, b_sc16, bias2d16 = prepare_lora_params(w, bias, lora_B,
                                                  param_dtype=jnp.bfloat16)
    out_bf16 = jax.block_until_ready(
        lora_forward(x, lora_A, w_t16, b_sc16, bias2d16, out_dtype=jnp.bfloat16))
    assert out_bf16.dtype == jnp.bfloat16
    assert jnp.allclose(out_bf16.astype(jnp.float32), ref, atol=6e-2, rtol=6e-2), \
        "bf16 mismatch vs reference"

    print("KERNEL_OK")
</pallas_src>

<mosaic_0001>
module attributes {stable_mosaic.version = 11 : i64} {
  func.func @_lora_kernel(%arg0: i32, %arg1: i32, %arg2: i32, %arg3: memref<8x256xf32, #tpu.memory_space<vmem>>, %arg4: memref<256x256xf32, #tpu.memory_space<vmem>>, %arg5: memref<8x128xf32, #tpu.memory_space<vmem>>, %arg6: memref<128x256xf32, #tpu.memory_space<vmem>>, %arg7: memref<1x256xf32, #tpu.memory_space<vmem>>, %arg8: memref<8x256xf32, #tpu.memory_space<vmem>>, %arg9: memref<8x256xf32, #tpu.memory_space<vmem>>) attributes {dimension_semantics = [#tpu.dimension_semantics<parallel>, #tpu.dimension_semantics<parallel>, #tpu.dimension_semantics<arbitrary>], iteration_bounds = array<i64: 1, 1, 1>, scalar_prefetch = 0 : i64, scratch_operands = 1 : i64, tpu.core_type = #tpu.core_type<tc>, window_params = [{transform_indices = @transform_0, window_bounds = array<i64: 8, 256>}, {transform_indices = @transform_1, window_bounds = array<i64: 256, 256>}, {transform_indices = @transform_2, window_bounds = array<i64: 8, 128>}, {transform_indices = @transform_3, window_bounds = array<i64: 128, 256>}, {transform_indices = @transform_4, window_bounds = array<i64: 1, 256>}, {transform_indices = @transform_5, window_bounds = array<i64: 8, 256>}]} {
    %c0_i32 = arith.constant 0 : i32
    %0 = arith.cmpi eq, %arg2, %c0_i32 : i32
    %1 = arith.extui %0 : i1 to i32
    %c0_i32_0 = arith.constant 0 : i32
    %2 = arith.cmpi ne, %1, %c0_i32_0 : i32
    scf.if %2 {
      %c0_10 = arith.constant 0 : index
      %c0_11 = arith.constant 0 : index
      %12 = vector.load %arg7[%c0_10, %c0_11] : memref<1x256xf32, #tpu.memory_space<vmem>>, vector<1x256xf32>
      %13 = vector.shape_cast %12 : vector<1x256xf32> to vector<1x256xf32>
      %14 = vector.broadcast %13 : vector<1x256xf32> to vector<8x256xf32>
      %c0_12 = arith.constant 0 : index
      %c0_13 = arith.constant 0 : index
      %15 = vector.load %arg9[%c0_12, %c0_13] : memref<8x256xf32, #tpu.memory_space<vmem>>, vector<8x256xf32>
      tpu.vector_store %arg9[%c0_12, %c0_13], %14 {strides = array<i32>} : memref<8x256xf32, #tpu.memory_space<vmem>>, vector<8x256xf32>,
    } else {
    }
    %c0 = arith.constant 0 : index
    %c0_1 = arith.constant 0 : index
    %3 = vector.load %arg9[%c0, %c0_1] : memref<8x256xf32, #tpu.memory_space<vmem>>, vector<8x256xf32>
    %c0_2 = arith.constant 0 : index
    %c0_3 = arith.constant 0 : index
    %4 = vector.load %arg3[%c0_2, %c0_3] : memref<8x256xf32, #tpu.memory_space<vmem>>, vector<8x256xf32>
    %c0_4 = arith.constant 0 : index
    %c0_5 = arith.constant 0 : index
    %5 = vector.load %arg4[%c0_4, %c0_5] : memref<256x256xf32, #tpu.memory_space<vmem>>, vector<256x256xf32>
    %cst = arith.constant dense<0.000000e+00> : vector<8x256xf32>
    %6 = tpu.matmul %4, %5, %cst {dimension_numbers = #tpu.dot_dimension_numbers<[1], [0], [0], [1], [0, 0, 1, 1], [], []>} : vector<8x256xf32>, vector<256x256xf32>, vector<8x256xf32> -> vector<8x256xf32>
    %7 = arith.addf %3, %6 : vector<8x256xf32>
    %c0_6 = arith.constant 0 : index
    %c0_7 = arith.constant 0 : index
    %8 = vector.load %arg9[%c0_6, %c0_7] : memref<8x256xf32, #tpu.memory_space<vmem>>, vector<8x256xf32>
    tpu.vector_store %arg9[%c0_6, %c0_7], %7 {strides = array<i32>} : memref<8x256xf32, #tpu.memory_space<vmem>>, vector<8x256xf32>,
    %c0_i32_8 = arith.constant 0 : i32
    %9 = arith.cmpi eq, %arg2, %c0_i32_8 : i32
    %10 = arith.extui %9 : i1 to i32
    %c0_i32_9 = arith.constant 0 : i32
    %11 = arith.cmpi ne, %10, %c0_i32_9 : i32
    scf.if %11 {
      %c0_10 = arith.constant 0 : index
      %c0_11 = arith.constant 0 : index
      %12 = vector.load %arg9[%c0_10, %c0_11] : memref<8x256xf32, #tpu.memory_space<vmem>>, vector<8x256xf32>
      %c0_12 = arith.constant 0 : index
      %c0_13 = arith.constant 0 : index
      %13 = vector.load %arg5[%c0_12, %c0_13] : memref<8x128xf32, #tpu.memory_space<vmem>>, vector<8x128xf32>
      %c0_14 = arith.constant 0 : index
      %c0_15 = arith.constant 0 : index
      %14 = vector.load %arg6[%c0_14, %c0_15] : memref<128x256xf32, #tpu.memory_space<vmem>>, vector<128x256xf32>
      %cst_16 = arith.constant dense<0.000000e+00> : vector<8x256xf32>
      %15 = tpu.matmul %13, %14, %cst_16 {dimension_numbers = #tpu.dot_dimension_numbers<[1], [0], [0], [1], [0, 0, 1, 1], [], []>} : vector<8x128xf32>, vector<128x256xf32>, vector<8x256xf32> -> vector<8x256xf32>
      %16 = arith.addf %12, %15 : vector<8x256xf32>
      %c0_17 = arith.constant 0 : index
      %c0_18 = arith.constant 0 : index
      %17 = vector.load %arg9[%c0_17, %c0_18] : memref<8x256xf32, #tpu.memory_space<vmem>>, vector<8x256xf32>
      tpu.vector_store %arg9[%c0_17, %c0_18], %16 {strides = array<i32>} : memref<8x256xf32, #tpu.memory_space<vmem>>, vector<8x256xf32>,
      %c0_19 = arith.constant 0 : index
      %c0_20 = arith.constant 0 : index
      %18 = vector.load %arg9[%c0_19, %c0_20] : memref<8x256xf32, #tpu.memory_space<vmem>>, vector<8x256xf32>
      %c0_21 = arith.constant 0 : index
      %c0_22 = arith.constant 0 : index
      %19 = vector.load %arg8[%c0_21, %c0_22] : memref<8x256xf32, #tpu.memory_space<vmem>>, vector<8x256xf32>
      tpu.vector_store %arg8[%c0_21, %c0_22], %18 {strides = array<i32>} : memref<8x256xf32, #tpu.memory_space<vmem>>, vector<8x256xf32>,
    } else {
    }
    return
  }
  func.func @transform_0(%arg0: i32, %arg1: i32, %arg2: i32) -> (i32, i32) {
    %c0_i32 = arith.constant 0 : i32
    return %arg0, %arg2 : i32, i32
  }
  func.func @transform_1(%arg0: i32, %arg1: i32, %arg2: i32) -> (i32, i32) {
    %c0_i32 = arith.constant 0 : i32
    return %arg2, %arg1 : i32, i32
  }
  func.func @transform_2(%arg0: i32, %arg1: i32, %arg2: i32) -> (i32, i32) {
    %c0_i32 = arith.constant 0 : i32
    %c0_i32_0 = arith.constant 0 : i32
    return %arg0, %c0_i32 : i32, i32
  }
  func.func @transform_3(%arg0: i32, %arg1: i32, %arg2: i32) -> (i32, i32) {
    %c0_i32 = arith.constant 0 : i32
    %c0_i32_0 = arith.constant 0 : i32
    return %c0_i32, %arg1 : i32, i32
  }
  func.func @transform_4(%arg0: i32, %arg1: i32, %arg2: i32) -> (i32, i32) {
    %c0_i32 = arith.constant 0 : i32
    %c0_i32_0 = arith.constant 0 : i32
    return %c0_i32, %arg1 : i32, i32
  }
  func.func @transform_5(%arg0: i32, %arg1: i32, %arg2: i32) -> (i32, i32) {
    %c0_i32 = arith.constant 0 : i32
    return %arg0, %arg1 : i32, i32
  }
}

</mosaic_0001>

<llo_original>
// kernel: tpu_custom_call.1
$region0: #{tpu_custom_call.1}
  #allocation0 [shape = 'u32[]', space=smem, size = 0x4, offset = 0x4, fixed_abs, tag = 'smem constant byte address 0x4 - core index']
  #allocation1 [shape = 'u32[144,128]{1,0:T(1,128)}', space=vmem, size = 0x12000, scoped, tag = 'internal scratch']
  #allocation2 [shape = 'f32[8,256]{1,0:T(8,128)}', space=vmem, size = 0x2000, scoped, tag = 'scratch operand']
  %s0 = inlined_call_operand.hbm [shape: f32[8,256], index: 0, kind: input, shape index: {}]
  %s1 = inlined_call_operand.hbm [shape: f32[256,256], index: 1, kind: input, shape index: {}]
  %s2 = inlined_call_operand.hbm [shape: f32[8,128], index: 2, kind: input, shape index: {}]
  %s3 = inlined_call_operand.hbm [shape: f32[128,256], index: 3, kind: input, shape index: {}]
  %s4 = inlined_call_operand.vmem [shape: f32[1,256], index: 4, kind: input, shape index: {}]
  %s5 = inlined_call_operand.hbm [shape: f32[8,256], index: 5, kind: output, shape index: {}]
  %s6 = sld [smem:[#allocation0]]
  $region54: #{tpu_custom_call.1} parent=0
    _
  %s8 = ssub.s32 1, %s6
  %s9 = scalar_select 0, %s8, %s6
  $region1: #{tpu_custom_call.1} parent=0
    #allocation3 [shape = 'u8[8192]{0}', space=vmem, size = 0x2000, scoped, tag = 'input window, operand 0, single buffered']
    #allocation4 [shape = 's32[1]{0}', space=sflag, size = 0x4, scoped, tag = 'scoped memory for tpu_custom_call.1']
    #allocation5 [shape = 's32[1]{0}', space=sflag, size = 0x4, scoped, tag = 'scoped memory for tpu_custom_call.1']
    #allocation6 [shape = 'u8[262144]{0}', space=vmem, size = 0x40000, scoped, tag = 'input window, operand 1, single buffered']
    #allocation7 [shape = 's32[1]{0}', space=sflag, size = 0x4, scoped, tag = 'scoped memory for tpu_custom_call.1']
    #allocation8 [shape = 'u8[4096]{0}', space=vmem, size = 0x1000, scoped, tag = 'input window, operand 2, single buffered']
    #allocation9 [shape = 'u8[131072]{0}', space=vmem, size = 0x20000, scoped, tag = 'input window, operand 3, single buffered']
    #allocation10 [shape = 's32[1]{0}', space=sflag, size = 0x4, scoped, tag = 'scoped memory for tpu_custom_call.1']
    #allocation11 [shape = 'u8[8192]{0}', space=vmem, size = 0x2000, scoped, tag = 'output window, operand 0, single buffered']
    %10 = vsyncpa [#allocation4], 0
    %11 = vsyncpa [#allocation7], 0
    %12 = vsyncpa [#allocation10], 0
    %13 = vsyncpa [#allocation5], 0
    // Predicated region
    $region2: #{tpu_custom_call.1} parent=1 // pred_check
      _
    $region3: #{tpu_custom_call.1} parent=1 // pred_check_branch
      %15 = sbr.rel (0) target = $region5
    $region4: #{tpu_custom_call.1} parent=1 // pred_region
      %s17 = ssub.s32 256, 256
      %18 = vsyncadd [#allocation4], %s17
      %s20 = sshll.u32 [#allocation3], 4
      %s21 = int_to_ptr.vmem [resolvable:$true] %s20
      %23 = dma.hbm_to_vmem [thread:$0]  %s0, 256, %s21, [#allocation4]
    $region5: #{tpu_custom_call.1} parent=1 // pred_fallthru
      _
    // Predicated region
    $region6: #{tpu_custom_call.1} parent=1 // pred_check
      _
    $region7: #{tpu_custom_call.1} parent=1 // pred_check_branch
      %25 = sbr.rel (0) target = $region9
    $region8: #{tpu_custom_call.1} parent=1 // pred_region
      %s27 = ssub.s32 8192, 8192
      %28 = vsyncadd [#allocation7], %s27
      %s29 = sshll.u32 [#allocation6], 4
      %s30 = int_to_ptr.vmem [resolvable:$true] %s29
      %35 = dma.hbm_to_vmem [thread:$0]  %s1, 8192, %s30, [#allocation7], 256, 256, 16
    $region9: #{tpu_custom_call.1} parent=1 // pred_fallthru
      _
    // Predicated region
    $region10: #{tpu_custom_call.1} parent=1 // pred_check
      _
    $region11: #{tpu_custom_call.1} parent=1 // pred_check_branch
      %37 = sbr.rel (0) target = $region13
    $region12: #{tpu_custom_call.1} parent=1 // pred_region
      %s39 = ssub.s32 128, 128
      %40 = vsyncadd [#allocation7], %s39
      %s42 = sshll.u32 [#allocation8], 4
      %s43 = int_to_ptr.vmem [resolvable:$true] %s42
      %45 = dma.hbm_to_vmem [thread:$0]  %s2, 128, %s43, [#allocation7]
    $region13: #{tpu_custom_call.1} parent=1 // pred_fallthru
      _
    // Predicated region
    $region14: #{tpu_custom_call.1} parent=1 // pred_check
      _
    $region15: #{tpu_custom_call.1} parent=1 // pred_check_branch
      %47 = sbr.rel (0) target = $region17
    $region16: #{tpu_custom_call.1} parent=1 // pred_region
      %s49 = ssub.s32 4096, 4096
      %50 = vsyncadd [#allocation10], %s49
      %s51 = sshll.u32 [#allocation9], 4
      %s52 = int_to_ptr.vmem [resolvable:$true] %s51
      %57 = dma.hbm_to_vmem [thread:$0]  %s3, 4096, %s52, [#allocation10], 256, 256, 16
    $region17: #{tpu_custom_call.1} parent=1 // pred_fallthru
      _
    // Predicated region
    $region18: #{tpu_custom_call.1} parent=1 // pred_check
      _
    $region19: #{tpu_custom_call.1} parent=1 // pred_check_branch
      %59 = sbr.rel (0) target = $region21
    $region20: #{tpu_custom_call.1} parent=1 // pred_region
      _
    $region21: #{tpu_custom_call.1} parent=1 // pred_fallthru
      _
    // Predicated region
    $region22: #{tpu_custom_call.1} parent=1 // pred_check
      _
    $region23: #{tpu_custom_call.1} parent=1 // pred_check_branch
      %61 = sbr.rel (0) target = $region25
    $region24: #{tpu_custom_call.1} parent=1 // pred_region
      %62 = dma.done [#allocation4], 256
    $region25: #{tpu_custom_call.1} parent=1 // pred_fallthru
      _
    // Predicated region
    $region26: #{tpu_custom_call.1} parent=1 // pred_check
      _
    $region27: #{tpu_custom_call.1} parent=1 // pred_check_branch
      %64 = sbr.rel (0) target = $region29
    $region28: #{tpu_custom_call.1} parent=1 // pred_region
      %65 = dma.done [#allocation7], 8192
    $region29: #{tpu_custom_call.1} parent=1 // pred_fallthru
      _
    // Predicated region
    $region30: #{tpu_custom_call.1} parent=1 // pred_check
      _
    $region31: #{tpu_custom_call.1} parent=1 // pred_check_branch
      %67 = sbr.rel (0) target = $region33
    $region32: #{tpu_custom_call.1} parent=1 // pred_region
      %68 = dma.done [#allocation7], 128
    $region33: #{tpu_custom_call.1} parent=1 // pred_fallthru
      _
    // Predicated region
    $region34: #{tpu_custom_call.1} parent=1 // pred_check
      _
    $region35: #{tpu_custom_call.1} parent=1 // pred_check_branch
      %70 = sbr.rel (0) target = $region37
    $region36: #{tpu_custom_call.1} parent=1 // pred_region
      %71 = dma.done [#allocation10], 4096
    $region37: #{tpu_custom_call.1} parent=1 // pred_fallthru
      _
    %p72 = scmp.eq.s32.totalorder 0, 0
    // Predicated region
    $region38: #{tpu_custom_call.1} parent=1 // pred_check
      %p73 = pneg %p72
    $region39: #{tpu_custom_call.1} parent=1 // pred_check_branch
      %75 = sbr.rel (%p73) target = $region41
    $region40: #{tpu_custom_call.1} parent=1 // pred_region
      %v76 = vld [vmem:[%s4] sm:$0x3]
      %v78 = vlaneseq
      %v79 = vshrl.u32 %v78, 7
      %v80 = vsub.s32 0, %v79
      %v81 = vrot.slane %v76, %v80
      %v82 = vlaneseq
      %v83 = vshrl.u32 %v82, 7
      %v84 = vsub.s32 1, %v83
      %v85 = vrot.slane %v76, %v84
      %88 = vst [vmem:[#allocation2] sm:$0xff] %v81
      %89 = vst [vmem:[#allocation2 + $0x8] sm:$0xff] %v85
    $region41: #{tpu_custom_call.1} parent=1 // pred_fallthru
      _
    %v90 = vld [vmem:[#allocation2] sm:$0xff]
    %v91 = vld [vmem:[#allocation2 + $0x8] sm:$0xff]
    %v92 = vld [vmem:[#allocation3] sm:$0xff]
    %v93 = vld [vmem:[#allocation3 + $0x8] sm:$0xff]
    %v94 = vld [vmem:[#allocation6] sm:$0xff]
    %v95 = vld [vmem:[#allocation6 + $0x8] sm:$0xff]
    %v96 = vld [vmem:[#allocation6 + $0x10] sm:$0xff]
    %v97 = vld [vmem:[#allocation6 + $0x18] sm:$0xff]
    %v98 = vld [vmem:[#allocation6 + $0x20] sm:$0xff]
    %v99 = vld [vmem:[#allocation6 + $0x28] sm:$0xff]
    %v100 = vld [vmem:[#allocation6 + $0x30] sm:$0xff]
    %v101 = vld [vmem:[#allocation6 + $0x38] sm:$0xff]
    %v102 = vld [vmem:[#allocation6 + $0x40] sm:$0xff]
    %v103 = vld [vmem:[#allocation6 + $0x48] sm:$0xff]
    %v104 = vld [vmem:[#allocation6 + $0x50] sm:$0xff]
    %v105 = vld [vmem:[#allocation6 + $0x58] sm:$0xff]
    %v106 = vld [vmem:[#allocation6 + $0x60] sm:$0xff]
    %v107 = vld [vmem:[#allocation6 + $0x68] sm:$0xff]
    %v108 = vld [vmem:[#allocation6 + $0x70] sm:$0xff]
    %v109 = vld [vmem:[#allocation6 + $0x78] sm:$0xff]
    %v110 = vld [vmem:[#allocation6 + $0x80] sm:$0xff]
    %v111 = vld [vmem:[#allocation6 + $0x88] sm:$0xff]
    %v112 = vld [vmem:[#allocation6 + $0x90] sm:$0xff]
    %v113 = vld [vmem:[#allocation6 + $0x98] sm:$0xff]
    %v114 = vld [vmem:[#allocation6 + $0xa0] sm:$0xff]
    %v115 = vld [vmem:[#allocation6 + $0xa8] sm:$0xff]
    %v116 = vld [vmem:[#allocation6 + $0xb0] sm:$0xff]
    %v117 = vld [vmem:[#allocation6 + $0xb8] sm:$0xff]
    %v118 = vld [vmem:[#allocation6 + $0xc0] sm:$0xff]
    %v119 = vld [vmem:[#allocation6 + $0xc8] sm:$0xff]
    %v120 = vld [vmem:[#allocation6 + $0xd0] sm:$0xff]
    %v121 = vld [vmem:[#allocation6 + $0xd8] sm:$0xff]
    %v122 = vld [vmem:[#allocation6 + $0xe0] sm:$0xff]
    %v123 = vld [vmem:[#allocation6 + $0xe8] sm:$0xff]
    %v124 = vld [vmem:[#allocation6 + $0xf0] sm:$0xff]
    %v125 = vld [vmem:[#allocation6 + $0xf8] sm:$0xff]
    %v126 = vld [vmem:[#allocation6 + $0x100] sm:$0xff]
    %v127 = vld [vmem:[#allocation6 + $0x108] sm:$0xff]
    %v128 = vld [vmem:[#allocation6 + $0x110] sm:$0xff]
    %v129 = vld [vmem:[#allocation6 + $0x118] sm:$0xff]
    %v130 = vld [vmem:[#allocation6 + $0x120] sm:$0xff]
    %v131 = vld [vmem:[#allocation6 + $0x128] sm:$0xff]
    %v132 = vld [vmem:[#allocation6 + $0x130] sm:$0xff]
    %v133 = vld [vmem:[#allocation6 + $0x138] sm:$0xff]
    %v134 = vld [vmem:[#allocation6 + $0x140] sm:$0xff]
    %v135 = vld [vmem:[#allocation6 + $0x148] sm:$0xff]
    %v136 = vld [vmem:[#allocation6 + $0x150] sm:$0xff]
    %v137 = vld [vmem:[#allocation6 + $0x158] sm:$0xff]
    %v138 = vld [vmem:[#allocation6 + $0x160] sm:$0xff]
    %v139 = vld [vmem:[#allocation6 + $0x168] sm:$0xff]
    %v140 = vld [vmem:[#allocation6 + $0x170] sm:$0xff]
    %v141 = vld [vmem:[#allocation6 + $0x178] sm:$0xff]
    %v142 = vld [vmem:[#allocation6 + $0x180] sm:$0xff]
    %v143 = vld [vmem:[#allocation6 + $0x188] sm:$0xff]
    %v144 = vld [vmem:[#allocation6 + $0x190] sm:$0xff]
    %v145 = vld [vmem:[#allocation6 + $0x198] sm:$0xff]
    %v146 = vld [vmem:[#allocation6 + $0x1a0] sm:$0xff]
    %v147 = vld [vmem:[#allocation6 + $0x1a8] sm:$0xff]
    %v148 = vld [vmem:[#allocation6 + $0x1b0] sm:$0xff]
    %v149 = vld [vmem:[#allocation6 + $0x1b8] sm:$0xff]
    %v150 = vld [vmem:[#allocation6 + $0x1c0] sm:$0xff]
    %v151 = vld [vmem:[#allocation6 + $0x1c8] sm:$0xff]
    %v152 = vld [vmem:[#allocation6 + $0x1d0] sm:$0xff]
    %v153 = vld [vmem:[#allocation6 + $0x1d8] sm:$0xff]
    %v154 = vld [vmem:[#allocation6 + $0x1e0] sm:$0xff]
    %v155 = vld [vmem:[#allocation6 + $0x1e8] sm:$0xff]
    %v156 = vld [vmem:[#allocation6 + $0x1f0] sm:$0xff]
    %v157 = vld [vmem:[#allocation6 + $0x1f8] sm:$0xff]
    %158 = vmatprep.subr.mxu0 %v95
    %159 = vmatpush1.msra.mxu0 %v94
    %160 = vmatprep.subr.mxu0 %v97
    %161 = vmatpush1.msra.mxu0 %v96
    %162 = vmatprep.subr.mxu0 %v99
    %163 = vmatpush1.msra.mxu0 %v98
    %164 = vmatprep.subr.mxu0 %v101
    %165 = vmatpush1.msra.mxu0 %v100
    %166 = vmatprep.subr.mxu0 %v103
    %167 = vmatpush1.msra.mxu0 %v102
    %168 = vmatprep.subr.mxu0 %v105
    %169 = vmatpush1.msra.mxu0 %v104
    %170 = vmatprep.subr.mxu0 %v107
    %171 = vmatpush1.msra.mxu0 %v106
    %172 = vmatprep.subr.mxu0 %v109
    %173 = vmatpush1.msra.mxu0 %v108
    %174 = vmatprep.subr.mxu0 %v111
    %175 = vmatpush1.msra.mxu0 %v110
    %176 = vmatprep.subr.mxu0 %v113
    %177 = vmatpush1.msra.mxu0 %v112
    %178 = vmatprep.subr.mxu0 %v115
    %179 = vmatpush1.msra.mxu0 %v114
    %180 = vmatprep.subr.mxu0 %v117
    %181 = vmatpush1.msra.mxu0 %v116
    %182 = vmatprep.subr.mxu0 %v119
    %183 = vmatpush1.msra.mxu0 %v118
    %184 = vmatprep.subr.mxu0 %v121
    %185 = vmatpush1.msra.mxu0 %v120
    %186 = vmatprep.subr.mxu0 %v123
    %187 = vmatpush1.msra.mxu0 %v122
    %188 = vmatprep.subr.mxu0 %v125
    %189 = vmatpush1.msra.mxu0 %v124
    %190 = vmatprep.subr.mxu0 %v127
    %191 = vmatpush1.msra.mxu0 %v126
    %192 = vmatprep.subr.mxu0 %v129
    %193 = vmatpush1.msra.mxu0 %v128
    %194 = vmatprep.subr.mxu0 %v131
    %195 = vmatpush1.msra.mxu0 %v130
    %196 = vmatprep.subr.mxu0 %v133
    %197 = vmatpush1.msra.mxu0 %v132
    %198 = vmatprep.subr.mxu0 %v135
    %199 = vmatpush1.msra.mxu0 %v134
    %200 = vmatprep.subr.mxu0 %v137
    %201 = vmatpush1.msra.mxu0 %v136
    %202 = vmatprep.subr.mxu0 %v139
    %203 = vmatpush1.msra.mxu0 %v138
    %204 = vmatprep.subr.mxu0 %v141
    %205 = vmatpush1.msra.mxu0 %v140
    %206 = vmatprep.subr.mxu0 %v143
    %207 = vmatpush1.msra.mxu0 %v142
    %208 = vmatprep.subr.mxu0 %v145
    %209 = vmatpush1.msra.mxu0 %v144
    %210 = vmatprep.subr.mxu0 %v147
    %211 = vmatpush1.msra.mxu0 %v146
    %212 = vmatprep.subr.mxu0 %v149
    %213 = vmatpush1.msra.mxu0 %v148
    %214 = vmatprep.subr.mxu0 %v151
    %215 = vmatpush1.msra.mxu0 %v150
    %216 = vmatprep.subr.mxu0 %v153
    %217 = vmatpush1.msra.mxu0 %v152
    %218 = vmatprep.subr.mxu0 %v155
    %219 = vmatpush1.msra.mxu0 %v154
    %220 = vmatprep.subr.mxu0 %v157
    %221 = vmatpush1.msra.mxu0 %v156
    %222 = vmatprep.mubr.f32.mxu0 %v93
    %223 = vmatmul.mubr.f32.gmra.mrb[0].mxu0 %v92
    %v224 = vpop.f32.mrb[0].mxu0
    %v225 = vadd.f32 0.0, %v224
    %v226 = vpop.f32.mrb[0].mxu0
    %v227 = vadd.f32 0.0, %v226
    %228 = vdwg.mxu0
    %v229 = vadd.f32 %v90, %v225
    %v230 = vadd.f32 %v91, %v227
    %231 = vst [vmem:[#allocation2] sm:$0xff] %v229
    %232 = vst [vmem:[#allocation2 + $0x8] sm:$0xff] %v230
    // Predicated region
    $region42: #{tpu_custom_call.1} parent=1 // pred_check
      %p233 = pneg %p72
    $region43: #{tpu_custom_call.1} parent=1 // pred_check_branch
      %235 = sbr.rel (%p233) target = $region45
    $region44: #{tpu_custom_call.1} parent=1 // pred_region
      %v236 = vld [vmem:[#allocation2] sm:$0xff]
      %v237 = vld [vmem:[#allocation2 + $0x8] sm:$0xff]
      %v238 = vld [vmem:[#allocation8] sm:$0xff]
      %v239 = vld [vmem:[#allocation9] sm:$0xff]
      %v240 = vld [vmem:[#allocation9 + $0x8] sm:$0xff]
      %v241 = vld [vmem:[#allocation9 + $0x10] sm:$0xff]
      %v242 = vld [vmem:[#allocation9 + $0x18] sm:$0xff]
      %v243 = vld [vmem:[#allocation9 + $0x20] sm:$0xff]
      %v244 = vld [vmem:[#allocation9 + $0x28] sm:$0xff]
      %v245 = vld [vmem:[#allocation9 + $0x30] sm:$0xff]
      %v246 = vld [vmem:[#allocation9 + $0x38] sm:$0xff]
      %v247 = vld [vmem:[#allocation9 + $0x40] sm:$0xff]
      %v248 = vld [vmem:[#allocation9 + $0x48] sm:$0xff]
      %v249 = vld [vmem:[#allocation9 + $0x50] sm:$0xff]
      %v250 = vld [vmem:[#allocation9 + $0x58] sm:$0xff]
      %v251 = vld [vmem:[#allocation9 + $0x60] sm:$0xff]
      %v252 = vld [vmem:[#allocation9 + $0x68] sm:$0xff]
      %v253 = vld [vmem:[#allocation9 + $0x70] sm:$0xff]
      %v254 = vld [vmem:[#allocation9 + $0x78] sm:$0xff]
      %v255 = vld [vmem:[#allocation9 + $0x80] sm:$0xff]
      %v256 = vld [vmem:[#allocation9 + $0x88] sm:$0xff]
      %v257 = vld [vmem:[#allocation9 + $0x90] sm:$0xff]
      %v258 = vld [vmem:[#allocation9 + $0x98] sm:$0xff]
      %v259 = vld [vmem:[#allocation9 + $0xa0] sm:$0xff]
      %v260 = vld [vmem:[#allocation9 + $0xa8] sm:$0xff]
      %v261 = vld [vmem:[#allocation9 + $0xb0] sm:$0xff]
      %v262 = vld [vmem:[#allocation9 + $0xb8] sm:$0xff]
      %v263 = vld [vmem:[#allocation9 + $0xc0] sm:$0xff]
      %v264 = vld [vmem:[#allocation9 + $0xc8] sm:$0xff]
      %v265 = vld [vmem:[#allocation9 + $0xd0] sm:$0xff]
      %v266 = vld [vmem:[#allocation9 + $0xd8] sm:$0xff]
      %v267 = vld [vmem:[#allocation9 + $0xe0] sm:$0xff]
      %v268 = vld [vmem:[#allocation9 + $0xe8] sm:$0xff]
      %v269 = vld [vmem:[#allocation9 + $0xf0] sm:$0xff]
      %v270 = vld [vmem:[#allocation9 + $0xf8] sm:$0xff]
      %271 = vmatprep.subr.mxu0 %v240
      %272 = vmatpush1.msra.mxu0 %v239
      %273 = vmatprep.subr.mxu0 %v242
      %274 = vmatpush1.msra.mxu0 %v241
      %275 = vmatprep.subr.mxu0 %v244
      %276 = vmatpush1.msra.mxu0 %v243
      %277 = vmatprep.subr.mxu0 %v246
      %278 = vmatpush1.msra.mxu0 %v245
      %279 = vmatprep.subr.mxu0 %v248
      %280 = vmatpush1.msra.mxu0 %v247
      %281 = vmatprep.subr.mxu0 %v250
      %282 = vmatpush1.msra.mxu0 %v249
      %283 = vmatprep.subr.mxu0 %v252
      %284 = vmatpush1.msra.mxu0 %v251
      %285 = vmatprep.subr.mxu0 %v254
      %286 = vmatpush1.msra.mxu0 %v253
      %287 = vmatprep.subr.mxu0 %v256
      %288 = vmatpush1.msra.mxu0 %v255
      %289 = vmatprep.subr.mxu0 %v258
      %290 = vmatpush1.msra.mxu0 %v257
      %291 = vmatprep.subr.mxu0 %v260
      %292 = vmatpush1.msra.mxu0 %v259
      %293 = vmatprep.subr.mxu0 %v262
      %294 = vmatpush1.msra.mxu0 %v261
      %295 = vmatprep.subr.mxu0 %v264
      %296 = vmatpush1.msra.mxu0 %v263
      %297 = vmatprep.subr.mxu0 %v266
      %298 = vmatpush1.msra.mxu0 %v265
      %299 = vmatprep.subr.mxu0 %v268
      %300 = vmatpush1.msra.mxu0 %v267
      %301 = vmatprep.subr.mxu0 %v270
      %302 = vmatpush1.msra.mxu0 %v269
      %303 = vmatprep.subr.mxu0 0.0
      %304 = vmatpush1.msra.mxu0 0.0
      %305 = vmatprep.subr.mxu0 0.0
      %306 = vmatpush1.msra.mxu0 0.0
      %307 = vmatprep.subr.mxu0 0.0
      %308 = vmatpush1.msra.mxu0 0.0
      %309 = vmatprep.subr.mxu0 0.0
      %310 = vmatpush1.msra.mxu0 0.0
      %311 = vmatprep.subr.mxu0 0.0
      %312 = vmatpush1.msra.mxu0 0.0
      %313 = vmatprep.subr.mxu0 0.0
      %314 = vmatpush1.msra.mxu0 0.0
      %315 = vmatprep.subr.mxu0 0.0
      %316 = vmatpush1.msra.mxu0 0.0
      %317 = vmatprep.subr.mxu0 0.0
      %318 = vmatpush1.msra.mxu0 0.0
      %319 = vmatprep.subr.mxu0 0.0
      %320 = vmatpush1.msra.mxu0 0.0
      %321 = vmatprep.subr.mxu0 0.0
      %322 = vmatpush1.msra.mxu0 0.0
      %323 = vmatprep.subr.mxu0 0.0
      %324 = vmatpush1.msra.mxu0 0.0
      %325 = vmatprep.subr.mxu0 0.0
      %326 = vmatpush1.msra.mxu0 0.0
      %327 = vmatprep.subr.mxu0 0.0
      %328 = vmatpush1.msra.mxu0 0.0
      %329 = vmatprep.subr.mxu0 0.0
      %330 = vmatpush1.msra.mxu0 0.0
      %331 = vmatprep.subr.mxu0 0.0
      %332 = vmatpush1.msra.mxu0 0.0
      %333 = vmatprep.subr.mxu0 0.0
      %334 = vmatpush1.msra.mxu0 0.0
      %335 = vmatprep.mubr.f32.mxu0 0.0
      %336 = vmatmul.mubr.f32.gmra.mrb[0].mxu0 %v238
      %v337 = vpop.f32.mrb[0].mxu0
      %v338 = vadd.f32 0.0, %v337
      %v339 = vpop.f32.mrb[0].mxu0
      %v340 = vadd.f32 0.0, %v339
      %341 = vdwg.mxu0
      %v342 = vadd.f32 %v236, %v338
      %v343 = vadd.f32 %v237, %v340
      %344 = vst [vmem:[#allocation2] sm:$0xff] %v342
      %345 = vst [vmem:[#allocation2 + $0x8] sm:$0xff] %v343
      %v346 = vld [vmem:[#allocation2] sm:$0xff]
      %v347 = vld [vmem:[#allocation2 + $0x8] sm:$0xff]
      %348 = vst [vmem:[#allocation11] sm:$0xff] %v346
      %349 = vst [vmem:[#allocation11 + $0x8] sm:$0xff] %v347
    $region45: #{tpu_custom_call.1} parent=1 // pred_fallthru
      _
    // Predicated region
    $region46: #{tpu_custom_call.1} parent=1 // pred_check
      _
    $region47: #{tpu_custom_call.1} parent=1 // pred_check_branch
      %351 = sbr.rel (0) target = $region49
    $region48: #{tpu_custom_call.1} parent=1 // pred_region
      %s353 = ssub.s32 256, 256
      %354 = vsyncadd [#allocation5], %s353
      %s356 = sshll.u32 [#allocation11], 4
      %s357 = int_to_ptr.vmem [resolvable:$true] %s356
      %359 = dma.vmem_to_hbm [thread:$0]  %s357, 256, %s5, [#allocation5]
    $region49: #{tpu_custom_call.1} parent=1 // pred_fallthru
      _
    // Predicated region
    $region50: #{tpu_custom_call.1} parent=1 // pred_check
      _
    $region51: #{tpu_custom_call.1} parent=1 // pred_check_branch
      %361 = sbr.rel (0) target = $region53
    $region52: #{tpu_custom_call.1} parent=1 // pred_region
      %362 = dma.done [#allocation5], 256
    $region53: #{tpu_custom_call.1} parent=1 // pred_fallthru
      _
    %363 = vsyncpa [#allocation4], 1
    %364 = vsyncpa [#allocation7], 1
    %365 = vsyncpa [#allocation10], 1
    %366 = vsyncpa [#allocation5], 1

</llo_original>
